<compile_context>
chip_gen: v7x
topology: tpu7x:2x2x1
jax: 0.10.0
libtpu: 0.0.40
codegen_flags: <defaults>
</compile_context>

<pallas_src>
import functools

import jax
import jax.numpy as jnp
from jax.experimental import pallas as pl
from jax.experimental.pallas import tpu as pltpu

_LANE = 128
_MAX_PACK = 16      # cap on rows folded into lanes (keeps static unroll small)


def _linear_kernel(x_ref, w_ref, b_ref, o_ref, *, seg_len, num_seg):
    """One batch tile of y = x @ w.T + b.

    x_ref: (TILE_ROWS, num_seg*seg_len) VMEM  -- num_seg packed rows per line
    w_ref: (1,         num_seg*seg_len) VMEM  -- weight, tiled num_seg times
    b_ref: (1, 1)                       SMEM  -- scalar bias
    o_ref: (num_seg, TILE_ROWS)         VMEM  -- lane-dense (row idx on lanes)
    """
    prod = x_ref[...] * w_ref[...]                       # VPU broadcast multiply
    rows = [
        jnp.sum(prod[:, j * seg_len:(j + 1) * seg_len], axis=-1)  # lane reduce
        for j in range(num_seg)                          # static unroll (<= 16)
    ]
    o_ref[...] = jnp.stack(rows, axis=0) + b_ref[0, 0]   # lane-dense store


def _vmem_capacity_bytes():
    """Physical VMEM per TensorCore; conservative fallback if unavailable."""
    try:
        cap = getattr(pltpu.get_tpu_info(), "vmem_capacity_bytes", 0)
        if cap and cap > 0:
            return int(cap)
    except Exception:
        pass
    return 64 * 1024 * 1024        # v7x per-TC size; safe lower bound everywhere


def _round_up(x, m):
    return ((x + m - 1) // m) * m


def _pick_tile_rows(n_rows, lane_width, itemsize, x_pipeline_budget):
    """Rows per grid step, sized from the VMEM budget (no artificial cap)."""
    if n_rows <= _LANE:
        return n_rows                                    # single full-extent block
    lane_padded = _round_up(lane_width, _LANE)           # VMEM lane padding
    bytes_per_row = 2 * lane_padded * itemsize           # double-buffered x
    tile = max(_LANE, (x_pipeline_budget // bytes_per_row) // _LANE * _LANE)
    tile = min(tile, (n_rows // _LANE) * _LANE)          # never exceed the array
    # Megacore (v7x has 2 TCs): make sure there are >= 2 tiles so the
    # "parallel" axis can be sharded, and prefer an even tile count so no core
    # is stuck alone with the remainder tile.  Also enables DMA/compute overlap.
    if pl.cdiv(n_rows, tile) == 1:
        tile = max(_LANE, _round_up(pl.cdiv(n_rows, 2), _LANE))
    num = pl.cdiv(n_rows, tile)
    if num > 2 and num % 2 == 1:
        alt = _round_up(pl.cdiv(n_rows, num + 1), _LANE)
        if alt >= _LANE and pl.cdiv(n_rows, alt) % 2 == 0:
            tile = alt
    return tile


@functools.partial(jax.jit, static_argnames=("tile_rows",))
def liner_model_forward(x, weight, bias, *, tile_rows=None):
    """Pallas equivalent of Liner_Model.forward.

    x:      (B, in_features) float32
    weight: (1, in_features) float32   (PyTorch nn.Linear layout, no transpose)
    bias:   (1,)             float32
    returns (B, 1) float32
    """
    batch, in_features = x.shape

    # ---- lane packing: fold k batch rows into the 128-lane axis when F < 128.
    pack = max(1, min(_MAX_PACK, _LANE // in_features)) if in_features < _LANE else 1
    if pack > 1 and batch % pack != 0:
        pack = 1   # remainder-row fixup not worth it here; fall back to plain path
    n_rows = batch // pack
    lane_width = pack * in_features

    x_packed = x.reshape(n_rows, lane_width)             # zero-copy (row-major)
    w_packed = jnp.tile(weight, (1, pack)) if pack > 1 else weight
    bias_2d = bias.reshape(1, 1)

    # ---- generation-aware tiling and explicit VMEM limit.
    itemsize = jnp.dtype(x.dtype).itemsize
    vmem_cap = _vmem_capacity_bytes()
    x_budget = (vmem_cap * 3) // 4       # double-buffered x: ~48 MiB v7x, ~96 MiB v5e/v6e
    vmem_limit = (vmem_cap * 9) // 10    # headroom for weight/output buffers + scratch
    if tile_rows is None:
        tile_rows = _pick_tile_rows(n_rows, lane_width, itemsize, x_budget)
    num_tiles = pl.cdiv(n_rows, tile_rows)

    kernel = functools.partial(_linear_kernel, seg_len=in_features, num_seg=pack)

    out = pl.pallas_call(
        kernel,
        out_shape=jax.ShapeDtypeStruct((pack, n_rows), jnp.float32),
        grid=(num_tiles,),
        in_specs=[
            # x: pipelined (TILE_ROWS, lane_width) blocks along the batch axis;
            # the final block may be partial (no wrapper-side padding).
            pl.BlockSpec((tile_rows, lane_width), lambda i: (i, 0)),
            # weight: full-extent block, resident across all grid steps.
            pl.BlockSpec((1, lane_width), lambda i: (0, 0)),
            # bias: scalar in SMEM.
            pl.BlockSpec(memory_space=pltpu.MemorySpace.SMEM),
        ],
        # Lane-dense output: packed-row index on the 128-multiple lane axis.
        out_specs=pl.BlockSpec((pack, tile_rows), lambda i: (0, i)),
        compiler_params=pltpu.CompilerParams(
            dimension_semantics=("parallel",),
            vmem_limit_bytes=vmem_limit,
        ),
    )(x_packed, w_packed, bias_2d)

    # out[j, r] = y[r*pack + j]  ->  (B, 1).  Tiny (pack, B/pack) transpose.
    return out.T.reshape(batch, 1)


if __name__ == "__main__":
    key = jax.random.PRNGKey(0)
    k_x, k_w, k_b = jax.random.split(key, 3)

    batch, in_features = 8, 32
    x = jax.random.normal(k_x, (batch, in_features), jnp.float32)
    bound = 1.0 / jnp.sqrt(jnp.float32(in_features))   # nn.Linear default init range
    weight = jax.random.uniform(k_w, (1, in_features), jnp.float32,
                                minval=-bound, maxval=bound)
    bias = jax.random.uniform(k_b, (1,), jnp.float32, minval=-bound, maxval=bound)

    out = liner_model_forward(x, weight, bias)
    out = jax.block_until_ready(out)

    # sanity check against plain-JAX reference
    ref = x @ weight.T + bias
    assert out.shape == (batch, 1)
    assert jnp.allclose(out, ref, atol=1e-5, rtol=1e-5)

    print("KERNEL_OK")
</pallas_src>

<mosaic_0001>
module attributes {stable_mosaic.version = 11 : i64} {
  func.func @_linear_kernel(%arg0: i32, %arg1: memref<2x128xf32, #tpu.memory_space<vmem>>, %arg2: memref<1x128xf32, #tpu.memory_space<vmem>>, %arg3: memref<1x1xf32, #tpu.memory_space<smem>>, %arg4: memref<4x2xf32, #tpu.memory_space<vmem>>) attributes {dimension_semantics = [#tpu.dimension_semantics<parallel>], iteration_bounds = array<i64: 1>, scalar_prefetch = 0 : i64, scratch_operands = 0 : i64, tpu.core_type = #tpu.core_type<tc>, window_params = [{transform_indices = @transform_0, window_bounds = array<i64: 2, 128>}, {pipeline_mode = #tpu.pipeline_mode<synchronous>, transform_indices = @transform_1, window_bounds = array<i64: 1, 128>}, {transform_indices = @transform_2, window_bounds = array<i64: 1, 1>}, {transform_indices = @transform_3, window_bounds = array<i64: 4, 2>}]} {
    %c0 = arith.constant 0 : index
    %c0_0 = arith.constant 0 : index
    %0 = vector.load %arg1[%c0, %c0_0] : memref<2x128xf32, #tpu.memory_space<vmem>>, vector<2x128xf32>
    %c0_1 = arith.constant 0 : index
    %c0_2 = arith.constant 0 : index
    %1 = vector.load %arg2[%c0_1, %c0_2] : memref<1x128xf32, #tpu.memory_space<vmem>>, vector<1x128xf32>
    %2 = vector.broadcast %1 : vector<1x128xf32> to vector<2x128xf32>
    %3 = arith.mulf %0, %2 : vector<2x128xf32>
    %4 = vector.extract_strided_slice %3 {offsets = [0, 0], sizes = [2, 32], strides = [1, 1]} : vector<2x128xf32> to vector<2x32xf32>
    %cst = arith.constant dense<0.000000e+00> : vector<2xf32>
    %5 = vector.multi_reduction <add>, %4, %cst [1] : vector<2x32xf32> to vector<2xf32>
    %6 = vector.extract_strided_slice %3 {offsets = [0, 32], sizes = [2, 32], strides = [1, 1]} : vector<2x128xf32> to vector<2x32xf32>
    %cst_3 = arith.constant dense<0.000000e+00> : vector<2xf32>
    %7 = vector.multi_reduction <add>, %6, %cst_3 [1] : vector<2x32xf32> to vector<2xf32>
    %8 = vector.extract_strided_slice %3 {offsets = [0, 64], sizes = [2, 32], strides = [1, 1]} : vector<2x128xf32> to vector<2x32xf32>
    %cst_4 = arith.constant dense<0.000000e+00> : vector<2xf32>
    %9 = vector.multi_reduction <add>, %8, %cst_4 [1] : vector<2x32xf32> to vector<2xf32>
    %10 = vector.extract_strided_slice %3 {offsets = [0, 96], sizes = [2, 32], strides = [1, 1]} : vector<2x128xf32> to vector<2x32xf32>
    %cst_5 = arith.constant dense<0.000000e+00> : vector<2xf32>
    %11 = vector.multi_reduction <add>, %10, %cst_5 [1] : vector<2x32xf32> to vector<2xf32>
    %12 = vector.shape_cast %5 : vector<2xf32> to vector<1x2xf32>
    %13 = vector.shape_cast %7 : vector<2xf32> to vector<1x2xf32>
    %14 = vector.shape_cast %9 : vector<2xf32> to vector<1x2xf32>
    %15 = vector.shape_cast %11 : vector<2xf32> to vector<1x2xf32>
    %16 = tpu.concatenate %12, %13, %14, %15 in 0 : vector<1x2xf32>, vector<1x2xf32>, vector<1x2xf32>, vector<1x2xf32> -> vector<4x2xf32>
    %c0_6 = arith.constant 0 : index
    %c0_7 = arith.constant 0 : index
    %17 = memref.load %arg3[%c0_6, %c0_7] : memref<1x1xf32, #tpu.memory_space<smem>>
    %18 = vector.broadcast %17 : f32 to vector<4x2xf32>
    %19 = arith.addf %16, %18 : vector<4x2xf32>
    %c0_8 = arith.constant 0 : index
    %c0_9 = arith.constant 0 : index
    %20 = vector.load %arg4[%c0_8, %c0_9] : memref<4x2xf32, #tpu.memory_space<vmem>>, vector<4x2xf32>
    tpu.vector_store %arg4[%c0_8, %c0_9], %19 {strides = array<i32>} : memref<4x2xf32, #tpu.memory_space<vmem>>, vector<4x2xf32>,
    return
  }
  func.func @transform_0(%arg0: i32) -> (i32, i32) {
    %c0_i32 = arith.constant 0 : i32
    %c0_i32_0 = arith.constant 0 : i32
    return %arg0, %c0_i32 : i32, i32
  }
  func.func @transform_1(%arg0: i32) -> (i32, i32) {
    %c0_i32 = arith.constant 0 : i32
    %c0_i32_0 = arith.constant 0 : i32
    %c0_i32_1 = arith.constant 0 : i32
    return %c0_i32, %c0_i32_0 : i32, i32
  }
  func.func @transform_2(%arg0: i32) -> (i32, i32) {
    %c0_i32 = arith.constant 0 : i32
    %c0_i32_0 = arith.constant 0 : i32
    %c0_i32_1 = arith.constant 0 : i32
    return %c0_i32, %c0_i32_0 : i32, i32
  }
  func.func @transform_3(%arg0: i32) -> (i32, i32) {
    %c0_i32 = arith.constant 0 : i32
    %c0_i32_0 = arith.constant 0 : i32
    return %c0_i32, %arg0 : i32, i32
  }
}

</mosaic_0001>

<llo_original>
// kernel: liner_model_forward.1
$region0: #{liner_model_forward.1}
  #allocation0 [shape = 'u32[]', space=smem, size = 0x4, offset = 0x4, fixed_abs, tag = 'smem constant byte address 0x4 - core index']
  #allocation1 [shape = 'u32[144,128]{1,0:T(1,128)}', space=vmem, size = 0x12000, scoped, tag = 'internal scratch']
  #allocation2 [shape = 'f32[1,1]{1,0:T(1,128)S(6)}', space=smem, size = 0x200, scoped, tag = 'scoped memory for liner_model_forward.1']
  %s0 = inlined_call_operand.vmem [shape: f32[2,128], index: 0, kind: input, shape index: {}]
  %s1 = inlined_call_operand.vmem [shape: f32[1,128], index: 1, kind: input, shape index: {}]
  %s2 = inlined_call_operand.<no memory space> [shape: f32[1,1], index: 2, kind: input, shape index: {}]
  %s3 = inlined_call_operand.vmem [shape: f32[4,2], index: 3, kind: output, shape index: {}]
  %s4 = sld [smem:[#allocation0]]
  $region22: #{liner_model_forward.1} parent=0
    _
  %s6 = ssub.s32 1, %s4
  %s7 = scalar_select 0, %s6, %s4
  %8 = sst [smem:[#allocation2]] %s2
  // Predicated region
  $region2: #{liner_model_forward.1} parent=0 // pred_check
    _
  $region3: #{liner_model_forward.1} parent=0 // pred_check_branch
    %10 = sbr.rel (0) target = $region5
  $region4: #{liner_model_forward.1} parent=0 // pred_region
    _
  $region5: #{liner_model_forward.1} parent=0 // pred_fallthru
    _
  // Predicated region
  $region6: #{liner_model_forward.1} parent=0 // pred_check
    _
  $region7: #{liner_model_forward.1} parent=0 // pred_check_branch
    %12 = sbr.rel (0) target = $region9
  $region8: #{liner_model_forward.1} parent=0 // pred_region
    _
  $region9: #{liner_model_forward.1} parent=0 // pred_fallthru
    _
  // Predicated region
  $region10: #{liner_model_forward.1} parent=0 // pred_check
    _
  $region11: #{liner_model_forward.1} parent=0 // pred_check_branch
    %14 = sbr.rel (0) target = $region13
  $region12: #{liner_model_forward.1} parent=0 // pred_region
    _
  $region13: #{liner_model_forward.1} parent=0 // pred_fallthru
    _
  %v15 = vld [vmem:[%s0] sm:$0x3]
  %v16 = vld [vmem:[%s1] sm:$0x1]
  %v18 = vlaneseq
  %v19 = vshrl.u32 %v18, 7
  %v20 = vsub.s32 0, %v19
  %v21 = vrot.slane %v16, %v20
  %v23 = vmul.f32 %v15, %v21
  %vm24 = vcmask 254976
  %v25 = vsel %vm24, %v23, 0.0
  %26 = vadd.xlane.f32.xlu0 %v25
  %v27 = vpop.xlane.xlu0 %26
  %29 = vrot.lane.b32.xlu0 %v23, 96
  %v30 = vpop.permute.xlu0 %29
  %v32 = vsel %vm24, %v30, 0.0
  %33 = vadd.xlane.f32.xlu0 %v32
  %v34 = vpop.xlane.xlu0 %33
  %35 = vrot.lane.b32.xlu0 %v23, 64
  %v36 = vpop.permute.xlu0 %35
  %v38 = vsel %vm24, %v36, 0.0
  %39 = vadd.xlane.f32.xlu0 %v38
  %v40 = vpop.xlane.xlu0 %39
  %41 = vrot.lane.b32.xlu0 %v23, 32
  %v42 = vpop.permute.xlu0 %41
  %v44 = vsel %vm24, %v42, 0.0
  %45 = vadd.xlane.f32.xlu0 %v44
  %v46 = vpop.xlane.xlu0 %45
  %v48 = vlaneseq
  %v49 = vand.u32 %v48, 127
  %v50 = vlaneseq
  %v51 = vshrl.u32 %v50, 7
  %v52 = vsub.s32 %v49, %v51
  %v53 = vrot.slane %v27, %v52
  %v56 = vlaneseq
  %v57 = vshrl.u32 %v56, 7
  %v58 = vsub.s32 %v49, %v57
  %v59 = vrot.slane %v34, %v58
  %v62 = vlaneseq
  %v63 = vshrl.u32 %v62, 7
  %v64 = vsub.s32 %v49, %v63
  %v65 = vrot.slane %v40, %v64
  %v68 = vlaneseq
  %v69 = vshrl.u32 %v68, 7
  %v70 = vsub.s32 %v49, %v69
  %v71 = vrot.slane %v46, %v70
  %vm73 = vcmask 1040384
  %v74 = vsel %vm73, %v53, %v59
  %vm75 = vcmask 1041408
  %v76 = vsel %vm75, %v74, %v65
  %vm77 = vcmask 1042432
  %v78 = vsel %vm77, %v76, %v71
  %s79 = sld [smem:[#allocation2]]
  %v80 = vstv %s79
  %v81 = vadd.f32 %v78, %v80
  %vm82 = vcmask 11264
  %83 = vst.msk [vmem:[%s3] sm:$0xf] %vm82, %v81
  // Predicated region
  $region14: #{liner_model_forward.1} parent=0 // pred_check
    _
  $region15: #{liner_model_forward.1} parent=0 // pred_check_branch
    %85 = sbr.rel (0) target = $region17
  $region16: #{liner_model_forward.1} parent=0 // pred_region
    _
  $region17: #{liner_model_forward.1} parent=0 // pred_fallthru
    _
  // Predicated region
  $region18: #{liner_model_forward.1} parent=0 // pred_check
    _
  $region19: #{liner_model_forward.1} parent=0 // pred_check_branch
    %87 = sbr.rel (0) target = $region21
  $region20: #{liner_model_forward.1} parent=0 // pred_region
    _
  $region21: #{liner_model_forward.1} parent=0 // pred_fallthru
    _

</llo_original>
